<compile_context>
chip_gen: v7x
topology: tpu7x:2x2x1
jax: 0.10.0
libtpu: 0.0.40
codegen_flags: <defaults>
</compile_context>

<pallas_src>
import jax
import jax.numpy as jnp
from jax.experimental import pallas as pl
from jax.experimental.pallas import tpu as pltpu

_LANES = 128


def _add_bias_kernel(w_ref, x_ref, o_ref):
    # w_ref: (1, 128) lane-dense weight row (same block every step -> VMEM resident)
    # x_ref / o_ref: (brows, 128).  One VPU add, one full-width store.
    o_ref[...] = (x_ref[...] + w_ref[...]).astype(o_ref.dtype)


def _pick_block_rows(rows: int, itemsize: int, max_block_rows: int) -> int:
    """Choose the row-block size for the (rows, 128) slab."""
    one_mib_rows = (1 << 20) // (_LANES * itemsize)
    # Small enough (<= ~1 MiB and <= max block): single block, shape == array.
    if rows <= min(max_block_rows, one_mib_rows):
        return rows
    # Otherwise use large multiple-of-8 blocks, capped so there are at least
    # 2 grid steps (lets the parallel grid shard across v7x's 2 TensorCores).
    half_rounded = (((rows + 1) // 2) + 7) // 8 * 8
    brows = min(max_block_rows, half_rounded)
    return max(brows, 8)


def submodule_forward(weight: jax.Array, x: jax.Array, *, block_rows: int = 4096) -> jax.Array:
    """out = weight + x, with weight (D,) broadcast along x's last dim (== D)."""
    d = weight.shape[0]
    assert x.shape[-1] == d, "last dim of x must match weight length"
    assert _LANES % d == 0, "weight length must divide the 128-lane width"

    orig_shape = x.shape
    out_dtype = jnp.result_type(x.dtype, weight.dtype)
    total = x.size

    # Zero-size edge case: nothing for the kernel to do.
    if total == 0:
        return (x + weight).astype(out_dtype)

    flat = x.reshape(-1)                      # metadata-only for contiguous x
    rows_full = total // _LANES               # number of complete 128-lane rows
    tail = total - rows_full * _LANES         # < 128 trailing elements

    # Full lane row of the weight pattern: [w0, w1, w0, w1, ...].
    w_lane = jnp.tile(weight, _LANES // d)

    parts = []

    if rows_full > 0:
        if tail == 0:
            x2d = flat.reshape(rows_full, _LANES)          # zero-copy fast path
        else:
            x2d = flat[: rows_full * _LANES].reshape(rows_full, _LANES)

        brows = _pick_block_rows(rows_full, jnp.dtype(x.dtype).itemsize, block_rows)
        grid = (pl.cdiv(rows_full, brows),)                # ragged last block OK

        w_row = w_lane.reshape(1, _LANES)

        out2d = pl.pallas_call(
            _add_bias_kernel,
            out_shape=jax.ShapeDtypeStruct((rows_full, _LANES), out_dtype),
            grid=grid,
            in_specs=[
                pl.BlockSpec((1, _LANES), lambda i: (0, 0)),      # weight: constant block
                pl.BlockSpec((brows, _LANES), lambda i: (i, 0)),  # input: streamed blocks
            ],
            out_specs=pl.BlockSpec((brows, _LANES), lambda i: (i, 0)),
            compiler_params=pltpu.CompilerParams(
                dimension_semantics=("parallel",),
            ),
        )(w_row, x2d)
        parts.append(out2d.reshape(-1))

    if tail > 0:
        # Tiny (<128 element) lane tail: plain JAX, far cheaper than padding
        # and re-slicing the whole tensor.  Row starts are d-aligned
        # (128 % d == 0), so the weight pattern for the tail starts at w[0].
        tail_x = flat[rows_full * _LANES:]
        parts.append((tail_x + w_lane[:tail]).astype(out_dtype))

    out_flat = parts[0] if len(parts) == 1 else jnp.concatenate(parts)
    return out_flat.reshape(orig_shape)


if __name__ == "__main__":
    key = jax.random.PRNGKey(0)
    wkey, k1, k2, k3 = jax.random.split(key, 4)

    # Deterministic "parameter" init (stand-in for torch.randn(2)).
    weight = jax.random.normal(wkey, (2,), dtype=jnp.float32)

    # Primary small input: [128, 2] -> 256 elements = exactly 2 lane rows,
    # exercises the zero-copy fast path of the kernel.
    x = jax.random.normal(k1, (128, 2), dtype=jnp.float32)
    out = submodule_forward(weight, x)
    jax.block_until_ready(out)
    expected = weight + x
    assert out.shape == expected.shape
    assert jnp.allclose(out, expected, atol=1e-6), "mismatch vs reference (fast path)"

    # Ragged path: 1000*2 = 2000 elements = 15 full rows + 80-element tail;
    # block_rows=8 forces a 2-step grid with a ragged last block.
    x_big = jax.random.normal(k2, (1000, 2), dtype=jnp.float32)
    out_big = submodule_forward(weight, x_big, block_rows=8)
    jax.block_until_ready(out_big)
    expected_big = weight + x_big
    assert out_big.shape == expected_big.shape
    assert jnp.allclose(out_big, expected_big, atol=1e-6), "mismatch vs reference (ragged grid)"

    # Tiny input (< 1 lane row): pure plain-JAX tail path.
    x_tiny = jax.random.normal(k3, (8, 2), dtype=jnp.float32)
    out_tiny = submodule_forward(weight, x_tiny)
    jax.block_until_ready(out_tiny)
    assert jnp.allclose(out_tiny, weight + x_tiny, atol=1e-6), "mismatch vs reference (tiny)"

    print("KERNEL_OK")
</pallas_src>

<mosaic_0001>
module attributes {stable_mosaic.version = 11 : i64} {
  func.func @_add_bias_kernel(%arg0: i32, %arg1: memref<1x128xf32, #tpu.memory_space<vmem>>, %arg2: memref<2x128xf32, #tpu.memory_space<vmem>>, %arg3: memref<2x128xf32, #tpu.memory_space<vmem>>) attributes {dimension_semantics = [#tpu.dimension_semantics<parallel>], iteration_bounds = array<i64: 1>, scalar_prefetch = 0 : i64, scratch_operands = 0 : i64, tpu.core_type = #tpu.core_type<tc>, window_params = [{pipeline_mode = #tpu.pipeline_mode<synchronous>, transform_indices = @transform_0, window_bounds = array<i64: 1, 128>}, {transform_indices = @transform_1, window_bounds = array<i64: 2, 128>}, {transform_indices = @transform_2, window_bounds = array<i64: 2, 128>}]} {
    %c0 = arith.constant 0 : index
    %c0_0 = arith.constant 0 : index
    %0 = vector.load %arg2[%c0, %c0_0] : memref<2x128xf32, #tpu.memory_space<vmem>>, vector<2x128xf32>
    %c0_1 = arith.constant 0 : index
    %c0_2 = arith.constant 0 : index
    %1 = vector.load %arg1[%c0_1, %c0_2] : memref<1x128xf32, #tpu.memory_space<vmem>>, vector<1x128xf32>
    %2 = vector.broadcast %1 : vector<1x128xf32> to vector<2x128xf32>
    %3 = arith.addf %0, %2 : vector<2x128xf32>
    %c0_3 = arith.constant 0 : index
    %c0_4 = arith.constant 0 : index
    %4 = vector.load %arg3[%c0_3, %c0_4] : memref<2x128xf32, #tpu.memory_space<vmem>>, vector<2x128xf32>
    tpu.vector_store %arg3[%c0_3, %c0_4], %3 {strides = array<i32>} : memref<2x128xf32, #tpu.memory_space<vmem>>, vector<2x128xf32>,
    return
  }
  func.func @transform_0(%arg0: i32) -> (i32, i32) {
    %c0_i32 = arith.constant 0 : i32
    %c0_i32_0 = arith.constant 0 : i32
    %c0_i32_1 = arith.constant 0 : i32
    return %c0_i32, %c0_i32_0 : i32, i32
  }
  func.func @transform_1(%arg0: i32) -> (i32, i32) {
    %c0_i32 = arith.constant 0 : i32
    %c0_i32_0 = arith.constant 0 : i32
    return %arg0, %c0_i32 : i32, i32
  }
  func.func @transform_2(%arg0: i32) -> (i32, i32) {
    %c0_i32 = arith.constant 0 : i32
    %c0_i32_0 = arith.constant 0 : i32
    return %arg0, %c0_i32 : i32, i32
  }
}

</mosaic_0001>

<llo_original>
// kernel: tpu_custom_call.1
$region0: #{tpu_custom_call.1}
  #allocation0 [shape = 'u32[]', space=smem, size = 0x4, offset = 0x4, fixed_abs, tag = 'smem constant byte address 0x4 - core index']
  #allocation1 [shape = 'u32[144,128]{1,0:T(1,128)}', space=vmem, size = 0x12000, scoped, tag = 'internal scratch']
  %s0 = inlined_call_operand.hbm [shape: f32[1,128], index: 0, kind: input, shape index: {}]
  %s1 = inlined_call_operand.vmem [shape: f32[2,128], index: 1, kind: input, shape index: {}]
  %s2 = inlined_call_operand.hbm [shape: f32[2,128], index: 2, kind: output, shape index: {}]
  %s3 = sld [smem:[#allocation0]]
  $region22: #{tpu_custom_call.1} parent=0
    _
  %s5 = ssub.s32 1, %s3
  %s6 = scalar_select 0, %s5, %s3
  $region1: #{tpu_custom_call.1} parent=0
    #allocation2 [shape = 'u8[512]{0}', space=vmem, size = 0x400, scoped, tag = 'input window, operand 0, single buffered']
    #allocation3 [shape = 's32[1]{0}', space=sflag, size = 0x4, scoped, tag = 'scoped memory for tpu_custom_call.1']
    #allocation4 [shape = 's32[1]{0}', space=sflag, size = 0x4, scoped, tag = 'scoped memory for tpu_custom_call.1']
    #allocation5 [shape = 'u8[1024]{0}', space=vmem, size = 0x400, scoped, tag = 'output window, operand 0, single buffered']
    %7 = vsyncpa [#allocation3], 0
    %8 = vsyncpa [#allocation4], 0
    // Predicated region
    $region2: #{tpu_custom_call.1} parent=1 // pred_check
      _
    $region3: #{tpu_custom_call.1} parent=1 // pred_check_branch
      %10 = sbr.rel (0) target = $region5
    $region4: #{tpu_custom_call.1} parent=1 // pred_region
      %s12 = ssub.s32 16, 16
      %13 = vsyncadd [#allocation3], %s12
      %s15 = sshll.u32 [#allocation2], 4
      %s16 = int_to_ptr.vmem [resolvable:$true] %s15
      %18 = dma.hbm_to_vmem [thread:$0]  %s0, 16, %s16, [#allocation3]
    $region5: #{tpu_custom_call.1} parent=1 // pred_fallthru
      _
    // Predicated region
    $region6: #{tpu_custom_call.1} parent=1 // pred_check
      _
    $region7: #{tpu_custom_call.1} parent=1 // pred_check_branch
      %20 = sbr.rel (0) target = $region9
    $region8: #{tpu_custom_call.1} parent=1 // pred_region
      _
    $region9: #{tpu_custom_call.1} parent=1 // pred_fallthru
      _
    // Predicated region
    $region10: #{tpu_custom_call.1} parent=1 // pred_check
      _
    $region11: #{tpu_custom_call.1} parent=1 // pred_check_branch
      %22 = sbr.rel (0) target = $region13
    $region12: #{tpu_custom_call.1} parent=1 // pred_region
      %23 = dma.done [#allocation3], 16
    $region13: #{tpu_custom_call.1} parent=1 // pred_fallthru
      _
    %v24 = vld [vmem:[%s1] sm:$0x3]
    %v25 = vld [vmem:[#allocation2] sm:$0x1]
    %v27 = vlaneseq
    %v28 = vshrl.u32 %v27, 7
    %v29 = vsub.s32 0, %v28
    %v30 = vrot.slane %v25, %v29
    %v32 = vadd.f32 %v24, %v30
    %33 = vst [vmem:[#allocation5] sm:$0x3] %v32
    // Predicated region
    $region14: #{tpu_custom_call.1} parent=1 // pred_check
      _
    $region15: #{tpu_custom_call.1} parent=1 // pred_check_branch
      %35 = sbr.rel (0) target = $region17
    $region16: #{tpu_custom_call.1} parent=1 // pred_region
      %s37 = ssub.s32 32, 32
      %38 = vsyncadd [#allocation4], %s37
      %s40 = sshll.u32 [#allocation5], 4
      %s41 = int_to_ptr.vmem [resolvable:$true] %s40
      %43 = dma.vmem_to_hbm [thread:$0]  %s41, 32, %s2, [#allocation4]
    $region17: #{tpu_custom_call.1} parent=1 // pred_fallthru
      _
    // Predicated region
    $region18: #{tpu_custom_call.1} parent=1 // pred_check
      _
    $region19: #{tpu_custom_call.1} parent=1 // pred_check_branch
      %45 = sbr.rel (0) target = $region21
    $region20: #{tpu_custom_call.1} parent=1 // pred_region
      %46 = dma.done [#allocation4], 32
    $region21: #{tpu_custom_call.1} parent=1 // pred_fallthru
      _
    %47 = vsyncpa [#allocation3], 1
    %48 = vsyncpa [#allocation4], 1

</llo_original>
